<compile_context>
chip_gen: v7x
topology: tpu7x:2x2x1
jax: 0.10.0
libtpu: 0.0.40
codegen_flags: <defaults>
</compile_context>

<pallas_src>
import functools

import jax
import jax.numpy as jnp
from jax.experimental import pallas as pl
from jax.experimental.pallas import tpu as pltpu


def _round_up(n, m):
    return ((n + m - 1) // m) * m


# ---------------------------------------------------------------------------
# Pallas kernel: one batch tile through the whole 3-layer MLP.
# ---------------------------------------------------------------------------
def code_disc_kernel(x_ref, w1_ref, b1_ref, w2_ref, b2_ref, w3_ref, b3_ref,
                     o_ref):
    # In-kernel bf16 cast of x (trivial VPU work, hidden under the MXU; the
    # wrapper no longer materializes a padded bf16 copy of x in HBM).
    x = x_ref[...].astype(jnp.bfloat16)              # (TILE_B, CODE_PAD)

    # Layer 1: bf16 MXU matmul (K=128 only half-fills the 256-deep MXU on
    # v6e/v7x but is ~14% of total FLOPs - accepted).  bf16 epilogue: layer 2
    # consumes bf16 anyway, so bias + LeakyReLU in bf16 halves VALU work.
    h1 = jnp.dot(x, w1_ref[...], preferred_element_type=jnp.float32)
    h1 = h1.astype(jnp.bfloat16) + b1_ref[...]
    h1 = jnp.maximum(h1, 0.2 * h1)                   # max-form LeakyReLU

    # Layer 2: dominant units x units matmul; f32 epilogue (feeds f32 output).
    h2 = jnp.dot(h1, w2_ref[...], preferred_element_type=jnp.float32)
    h2 = h2 + b2_ref[...]
    h2 = jnp.maximum(h2, 0.2 * h2)                   # max-form LeakyReLU

    # Layer 3: out_features == 1 -> VPU multiply + lane (XLU) reduction
    # instead of an MXU pass that would produce a single useful column.
    h3 = jnp.sum(h2 * w3_ref[...], axis=-1, keepdims=True) + b3_ref[...]

    o_ref[...] = h3.astype(o_ref.dtype)


def code_discriminator_pallas(x, params, tile_b=512):
    """x: (B, code_size) f32.  params: padded / spectrally-normalized weights."""
    w1, b1 = params["w1"], params["b1"]
    w2, b2 = params["w2"], params["b2"]
    w3, b3 = params["w3"], params["b3"]

    B, code = x.shape
    code_pad, units_pad = w1.shape

    # --- batch tiling --------------------------------------------------------
    #  * multiple of 16 (bf16 sublane tile (16,128)), capped at 512,
    #  * halved until the grid has >= 2 (even) steps when possible, so the
    #    "parallel" batch axis really splits across v7x's two TensorCores and
    #    the x-tile prefetch pipeline has depth.
    tile_b = _round_up(max(16, min(int(tile_b), 512)), 16)
    b16 = _round_up(B, 16)
    while tile_b > 16:
        steps = pl.cdiv(b16, tile_b)
        if steps >= 2 and steps % 2 == 0:
            break
        tile_b = max(16, _round_up(tile_b // 2, 16))
    b_pad = _round_up(B, tile_b)

    # Single fused pad (batch rows to the tile, feature cols to 128); x stays
    # f32 here - the bf16 cast happens inside the kernel.
    pad_b, pad_f = b_pad - B, code_pad - code
    if pad_b or pad_f:
        x = jnp.pad(x, ((0, pad_b), (0, pad_f)))

    grid = (b_pad // tile_b,)

    flops = 2 * b_pad * (code_pad * units_pad + units_pad * units_pad
                         + units_pad)
    bytes_accessed = (b_pad * code_pad * 4                    # x (f32)
                      + code_pad * units_pad * 2              # w1 (bf16)
                      + units_pad * 2                         # b1 (bf16)
                      + units_pad * units_pad * 2             # w2 (bf16)
                      + units_pad * 4 * 2                     # b2, w3 (f32)
                      + 4                                     # b3
                      + b_pad * 4)                            # out

    const = lambda i: (0, 0)  # weights: same (only) block every grid step
    out = pl.pallas_call(
        code_disc_kernel,
        out_shape=jax.ShapeDtypeStruct((b_pad, 1), jnp.float32),
        grid=grid,
        in_specs=[
            pl.BlockSpec((tile_b, code_pad), lambda i: (i, 0)),   # x (f32)
            pl.BlockSpec((code_pad, units_pad), const),           # w1 (bf16)
            pl.BlockSpec((1, units_pad), const),                  # b1 (bf16)
            pl.BlockSpec((units_pad, units_pad), const),          # w2 (bf16)
            pl.BlockSpec((1, units_pad), const),                  # b2 (f32)
            pl.BlockSpec((1, units_pad), const),                  # w3 (f32)
            pl.BlockSpec((1, 1), const),                          # b3 (f32)
        ],
        out_specs=pl.BlockSpec((tile_b, 1), lambda i: (i, 0)),
        compiler_params=pltpu.CompilerParams(
            dimension_semantics=("parallel",),     # shard batch on v7x's 2 TCs
            vmem_limit_bytes=48 * 1024 * 1024),    # headroom vs v7x 64 MiB
        cost_estimate=pl.CostEstimate(flops=flops, transcendentals=0,
                                      bytes_accessed=bytes_accessed),
    )(x, w1, b1, w2, b2, w3, b3)
    return out[:B]


# ---------------------------------------------------------------------------
# Parameter setup (glue): deterministic init + spectral norm + pad/cast.
# ---------------------------------------------------------------------------
def _l2_normalize(v, eps=1e-12):
    return v / (jnp.linalg.norm(v) + eps)


def spectral_normalize(w, key, eps=1e-12):
    """One power iteration (PyTorch default n_power_iterations=1, eps=1e-12).

    w: (out_features, in_features) -> returns w / sigma.
    """
    out_f, _ = w.shape
    u = _l2_normalize(jax.random.normal(key, (out_f,), dtype=w.dtype), eps)
    v = _l2_normalize(w.T @ u, eps)
    u = _l2_normalize(w @ v, eps)
    sigma = u @ (w @ v)
    return w / sigma


def init_params(key, code_size, num_units):
    """nn.Linear-style init, spectral norm, transpose to (in,out), zero-pad
    feature dims to multiples of 128, cast MXU-side tensors to bf16."""
    ks = jax.random.split(key, 9)

    def linear_init(kw, kb, fan_in, fan_out):
        bound = 1.0 / jnp.sqrt(fan_in)
        w = jax.random.uniform(kw, (fan_out, fan_in), jnp.float32, -bound, bound)
        b = jax.random.uniform(kb, (fan_out,), jnp.float32, -bound, bound)
        return w, b

    w1, b1 = linear_init(ks[0], ks[1], code_size, num_units)
    w2, b2 = linear_init(ks[2], ks[3], num_units, num_units)
    w3, b3 = linear_init(ks[4], ks[5], num_units, 1)

    w1 = spectral_normalize(w1, ks[6])
    w2 = spectral_normalize(w2, ks[7])
    w3 = spectral_normalize(w3, ks[8])

    code_pad = _round_up(code_size, 128)
    units_pad = _round_up(num_units, 128)

    w1p = jnp.zeros((code_pad, units_pad), jnp.float32
                    ).at[:code_size, :num_units].set(w1.T)
    w2p = jnp.zeros((units_pad, units_pad), jnp.float32
                    ).at[:num_units, :num_units].set(w2.T)
    b1p = jnp.zeros((1, units_pad), jnp.float32).at[0, :num_units].set(b1)
    b2p = jnp.zeros((1, units_pad), jnp.float32).at[0, :num_units].set(b2)
    w3p = jnp.zeros((1, units_pad), jnp.float32).at[0, :num_units].set(w3[0])
    b3p = b3.reshape(1, 1)

    return {
        "w1": w1p.astype(jnp.bfloat16), "b1": b1p.astype(jnp.bfloat16),
        "w2": w2p.astype(jnp.bfloat16), "b2": b2p,
        "w3": w3p, "b3": b3p,
        "code_size": code_size, "num_units": num_units,
    }


# ---------------------------------------------------------------------------
# Pure-JAX reference: un-padded math, mirroring the kernel's quantization
# points (bf16 MXU operands, bf16 layer-1 epilogue, f32 layer-2 epilogue).
# Verifies both the MLP math and that padding is benign.
# ---------------------------------------------------------------------------
def code_discriminator_ref(x, p):
    code, units = p["code_size"], p["num_units"]
    w1 = p["w1"][:code, :units].astype(jnp.float32)
    w2 = p["w2"][:units, :units].astype(jnp.float32)
    b1 = p["b1"][0, :units]                      # bf16 (matches kernel)
    b2 = p["b2"][0, :units]
    w3 = p["w3"][0, :units]
    b3 = p["b3"][0, 0]

    xq = x.astype(jnp.bfloat16).astype(jnp.float32)
    h1 = (xq @ w1).astype(jnp.bfloat16) + b1     # bf16 epilogue, as in kernel
    h1 = jnp.maximum(h1, 0.2 * h1)
    h2 = h1.astype(jnp.float32) @ w2 + b2        # f32 epilogue, as in kernel
    h2 = jnp.maximum(h2, 0.2 * h2)
    h3 = jnp.sum(h2 * w3, axis=-1, keepdims=True) + b3
    return h3


if __name__ == "__main__":
    # Small shapes consistent with the module (code_size=100 kept, num_units
    # scaled 750 -> 200); batch 256 -> auto tile_b=128 -> 2 pipelined steps.
    B, CODE, UNITS = 256, 100, 200

    key = jax.random.PRNGKey(0)
    k_x, k_p = jax.random.split(key)
    x = jax.random.normal(k_x, (B, CODE), dtype=jnp.float32)
    params = init_params(k_p, CODE, UNITS)

    run = jax.jit(functools.partial(code_discriminator_pallas))
    out = jax.block_until_ready(run(x, params))

    ref = code_discriminator_ref(x, params)
    assert out.shape == (B, 1), out.shape
    assert jnp.allclose(out, ref, atol=2e-3, rtol=2e-3), (
        float(jnp.max(jnp.abs(out - ref))))

    print("KERNEL_OK")
</pallas_src>

<mosaic_0001>
module attributes {stable_mosaic.version = 11 : i64} {
  func.func @code_disc_kernel(%arg0: i32, %arg1: memref<128x128xf32, #tpu.memory_space<vmem>>, %arg2: memref<128x256xbf16, #tpu.memory_space<vmem>>, %arg3: memref<1x256xbf16, #tpu.memory_space<vmem>>, %arg4: memref<256x256xbf16, #tpu.memory_space<vmem>>, %arg5: memref<1x256xf32, #tpu.memory_space<vmem>>, %arg6: memref<1x256xf32, #tpu.memory_space<vmem>>, %arg7: memref<1x1xf32, #tpu.memory_space<vmem>>, %arg8: memref<128x1xf32, #tpu.memory_space<vmem>>) attributes {dimension_semantics = [#tpu.dimension_semantics<parallel>], iteration_bounds = array<i64: 2>, scalar_prefetch = 0 : i64, scratch_operands = 0 : i64, tpu.core_type = #tpu.core_type<tc>, window_params = [{transform_indices = @transform_0, window_bounds = array<i64: 128, 128>}, {pipeline_mode = #tpu.pipeline_mode<synchronous>, transform_indices = @transform_1, window_bounds = array<i64: 128, 256>}, {pipeline_mode = #tpu.pipeline_mode<synchronous>, transform_indices = @transform_2, window_bounds = array<i64: 1, 256>}, {pipeline_mode = #tpu.pipeline_mode<synchronous>, transform_indices = @transform_3, window_bounds = array<i64: 256, 256>}, {pipeline_mode = #tpu.pipeline_mode<synchronous>, transform_indices = @transform_4, window_bounds = array<i64: 1, 256>}, {pipeline_mode = #tpu.pipeline_mode<synchronous>, transform_indices = @transform_5, window_bounds = array<i64: 1, 256>}, {pipeline_mode = #tpu.pipeline_mode<synchronous>, transform_indices = @transform_6, window_bounds = array<i64: 1, 1>}, {transform_indices = @transform_7, window_bounds = array<i64: 128, 1>}]} {
    %c0 = arith.constant 0 : index
    %c0_0 = arith.constant 0 : index
    %0 = vector.load %arg1[%c0, %c0_0] : memref<128x128xf32, #tpu.memory_space<vmem>>, vector<128x128xf32>
    %1 = arith.truncf %0 : vector<128x128xf32> to vector<128x128xbf16>
    %c0_1 = arith.constant 0 : index
    %c0_2 = arith.constant 0 : index
    %2 = vector.load %arg2[%c0_1, %c0_2] : memref<128x256xbf16, #tpu.memory_space<vmem>>, vector<128x256xbf16>
    %cst = arith.constant dense<0.000000e+00> : vector<128x256xf32>
    %3 = tpu.matmul %1, %2, %cst {dimension_numbers = #tpu.dot_dimension_numbers<[1], [0], [0], [1], [0, 0, 1, 1], [], []>} : vector<128x128xbf16>, vector<128x256xbf16>, vector<128x256xf32> -> vector<128x256xf32>
    %4 = arith.truncf %3 : vector<128x256xf32> to vector<128x256xbf16>
    %c0_3 = arith.constant 0 : index
    %c0_4 = arith.constant 0 : index
    %5 = vector.load %arg3[%c0_3, %c0_4] : memref<1x256xbf16, #tpu.memory_space<vmem>>, vector<1x256xbf16>
    %6 = vector.broadcast %5 : vector<1x256xbf16> to vector<128x256xbf16>
    %7 = arith.addf %4, %6 : vector<128x256xbf16>
    %cst_5 = arith.constant 2.001950e-01 : bf16
    %8 = vector.broadcast %cst_5 : bf16 to vector<128x256xbf16>
    %9 = arith.mulf %8, %7 : vector<128x256xbf16>
    %10 = arith.maximumf %7, %9 : vector<128x256xbf16>
    %c0_6 = arith.constant 0 : index
    %c0_7 = arith.constant 0 : index
    %11 = vector.load %arg4[%c0_6, %c0_7] : memref<256x256xbf16, #tpu.memory_space<vmem>>, vector<256x256xbf16>
    %cst_8 = arith.constant dense<0.000000e+00> : vector<128x256xf32>
    %12 = tpu.matmul %10, %11, %cst_8 {dimension_numbers = #tpu.dot_dimension_numbers<[1], [0], [0], [1], [0, 0, 1, 1], [], []>} : vector<128x256xbf16>, vector<256x256xbf16>, vector<128x256xf32> -> vector<128x256xf32>
    %c0_9 = arith.constant 0 : index
    %c0_10 = arith.constant 0 : index
    %13 = vector.load %arg5[%c0_9, %c0_10] : memref<1x256xf32, #tpu.memory_space<vmem>>, vector<1x256xf32>
    %14 = vector.broadcast %13 : vector<1x256xf32> to vector<128x256xf32>
    %15 = arith.addf %12, %14 : vector<128x256xf32>
    %cst_11 = arith.constant 2.000000e-01 : f32
    %16 = vector.broadcast %cst_11 : f32 to vector<128x256xf32>
    %17 = arith.mulf %16, %15 : vector<128x256xf32>
    %18 = arith.maximumf %15, %17 : vector<128x256xf32>
    %c0_12 = arith.constant 0 : index
    %c0_13 = arith.constant 0 : index
    %19 = vector.load %arg6[%c0_12, %c0_13] : memref<1x256xf32, #tpu.memory_space<vmem>>, vector<1x256xf32>
    %20 = vector.broadcast %19 : vector<1x256xf32> to vector<128x256xf32>
    %21 = arith.mulf %18, %20 : vector<128x256xf32>
    %cst_14 = arith.constant dense<0.000000e+00> : vector<128xf32>
    %22 = vector.multi_reduction <add>, %21, %cst_14 [1] : vector<128x256xf32> to vector<128xf32>
    %23 = vector.shape_cast %22 : vector<128xf32> to vector<128x1xf32>
    %c0_15 = arith.constant 0 : index
    %c0_16 = arith.constant 0 : index
    %24 = vector.load %arg7[%c0_15, %c0_16] : memref<1x1xf32, #tpu.memory_space<vmem>>, vector<1x1xf32>
    %25 = vector.broadcast %24 : vector<1x1xf32> to vector<128x1xf32>
    %26 = arith.addf %23, %25 : vector<128x1xf32>
    %c0_17 = arith.constant 0 : index
    %c0_18 = arith.constant 0 : index
    %27 = vector.load %arg8[%c0_17, %c0_18] : memref<128x1xf32, #tpu.memory_space<vmem>>, vector<128x1xf32>
    tpu.vector_store %arg8[%c0_17, %c0_18], %26 {strides = array<i32>} : memref<128x1xf32, #tpu.memory_space<vmem>>, vector<128x1xf32>,
    return
  }
  func.func @transform_0(%arg0: i32) -> (i32, i32) {
    %c0_i32 = arith.constant 0 : i32
    %c0_i32_0 = arith.constant 0 : i32
    return %arg0, %c0_i32 : i32, i32
  }
  func.func @transform_1(%arg0: i32) -> (i32, i32) {
    %c0_i32 = arith.constant 0 : i32
    %c0_i32_0 = arith.constant 0 : i32
    %c0_i32_1 = arith.constant 0 : i32
    return %c0_i32, %c0_i32_0 : i32, i32
  }
  func.func @transform_2(%arg0: i32) -> (i32, i32) {
    %c0_i32 = arith.constant 0 : i32
    %c0_i32_0 = arith.constant 0 : i32
    %c0_i32_1 = arith.constant 0 : i32
    return %c0_i32, %c0_i32_0 : i32, i32
  }
  func.func @transform_3(%arg0: i32) -> (i32, i32) {
    %c0_i32 = arith.constant 0 : i32
    %c0_i32_0 = arith.constant 0 : i32
    %c0_i32_1 = arith.constant 0 : i32
    return %c0_i32, %c0_i32_0 : i32, i32
  }
  func.func @transform_4(%arg0: i32) -> (i32, i32) {
    %c0_i32 = arith.constant 0 : i32
    %c0_i32_0 = arith.constant 0 : i32
    %c0_i32_1 = arith.constant 0 : i32
    return %c0_i32, %c0_i32_0 : i32, i32
  }
  func.func @transform_5(%arg0: i32) -> (i32, i32) {
    %c0_i32 = arith.constant 0 : i32
    %c0_i32_0 = arith.constant 0 : i32
    %c0_i32_1 = arith.constant 0 : i32
    return %c0_i32, %c0_i32_0 : i32, i32
  }
  func.func @transform_6(%arg0: i32) -> (i32, i32) {
    %c0_i32 = arith.constant 0 : i32
    %c0_i32_0 = arith.constant 0 : i32
    %c0_i32_1 = arith.constant 0 : i32
    return %c0_i32, %c0_i32_0 : i32, i32
  }
  func.func @transform_7(%arg0: i32) -> (i32, i32) {
    %c0_i32 = arith.constant 0 : i32
    %c0_i32_0 = arith.constant 0 : i32
    return %arg0, %c0_i32 : i32, i32
  }
}

</mosaic_0001>

<llo_original>
// kernel: code_discriminator_pallas.1
$region0: #{code_discriminator_pallas.1}
  #allocation0 [shape = 'u32[]', space=smem, size = 0x4, offset = 0x4, fixed_abs, tag = 'smem constant byte address 0x4 - core index']
  #allocation1 [shape = 'u32[144,128]{1,0:T(1,128)}', space=vmem, size = 0x12000, scoped, tag = 'internal scratch']
  #allocation2 [shape = 'f32[1,1]{1,0:T(1,128)S(1)}', space=vmem, size = 0x200, scoped, tag = 'scoped memory for code_discriminator_pallas.1']
  %s0 = inlined_call_operand.vmem [shape: f32[256,128], index: 0, kind: input, shape index: {}]
  %s1 = inlined_call_operand.vmem [shape: bf16[128,256], index: 1, kind: input, shape index: {}]
  %s2 = inlined_call_operand.vmem [shape: bf16[1,256], index: 2, kind: input, shape index: {}]
  %s3 = inlined_call_operand.vmem [shape: bf16[256,256], index: 3, kind: input, shape index: {}]
  %s4 = inlined_call_operand.vmem [shape: f32[1,256], index: 4, kind: input, shape index: {}]
  %s5 = inlined_call_operand.vmem [shape: f32[1,256], index: 5, kind: input, shape index: {}]
  %s6 = inlined_call_operand.<no memory space> [shape: f32[1,1], index: 6, kind: input, shape index: {}]
  %s7 = inlined_call_operand.vmem [shape: f32[256,1], index: 7, kind: output, shape index: {}]
  %s8 = sld [smem:[#allocation0]]
  $region61: #{code_discriminator_pallas.1} parent=0
    _
  %s10 = ssub.s32 1, %s8
  %s11 = scalar_select 0, %s10, %s8
  %v12 = vstv %s6
  %13 = vst [vmem:[#allocation2] sm:$0x1] %v12
  loop: start=0, step=1, limit=4
  $region2: #{code_discriminator_pallas.1} parent=0 // loop_pre_header
    _
  $region3: #{code_discriminator_pallas.1} parent=0 // loop_header
    %s15 = sphi 0, %s19
    %p16 = scmp.ge.s32.totalorder %s15, 4
    %s25 = sphi 0, %s27
    %s28 = sphi 0, %s25
    %s29 = sphi 0, %s28
    %s45 = sphi 0, %s29
    %s49 = sphi 0, %s49
    %s51 = sphi 0, %s49
    %s52 = sphi 0, %s51
    %s66 = sphi 0, %s52
    %s70 = sphi 0, %s70
    %s72 = sphi 0, %s70
    %s73 = sphi 0, %s72
    %s87 = sphi 0, %s73
    %s91 = sphi 0, %s91
    %s93 = sphi 0, %s91
    %s94 = sphi 0, %s93
    %s108 = sphi 0, %s94
    %s112 = sphi 0, %s112
    %s114 = sphi 0, %s112
    %s115 = sphi 0, %s114
    %s129 = sphi 0, %s115
    %s133 = sphi 0, %s133
    %s135 = sphi 0, %s133
    %s136 = sphi 0, %s135
    %s150 = sphi 0, %s136
    %s154 = sphi 0, %s154
    %s156 = sphi 0, %s154
    %s157 = sphi 0, %s156
    %s171 = sphi 0, %s157
    %s177 = sphi 0, %s179
    %s180 = sphi 0, %s177
    %s181 = sphi 0, %s180
    %s197 = sphi 0, %s181
  $region4: #{code_discriminator_pallas.1} parent=0 // loop_header_branch
    %18 = sbr.rel (%p16) target = $region8
  $region5: #{code_discriminator_pallas.1} parent=0 // loop_body
    %s20 = ssub.s32 %s15, 1
    %s21 = ssub.s32 %s15, 2
    %s22 = sadd.s32 %s15, 1
    %s23 = ssub.s32 %s15, %s22
    %p24 = scmp.eq.s32.totalorder %s23, 0
    %s26 = sadd.s32 %s25, 1
    %s27 = scalar_select %p24, %s25, %s26
    %p30 = pneg %p24
    %p31 = scmp.eq.s32.totalorder %s15, 1
    %p32 = por %p30, %p31
    %p33 = scmp.ne.s32.totalorder %s25, %s28
    %p34 = scmp.eq.s32.totalorder %s15, 0
    %p35 = por %p33, %p34
    %p36 = scmp.ne.s32.totalorder %s25, %s28
    %p37 = scmp.eq.s32.totalorder %s20, 1
    %p38 = por %p36, %p37
    %p39 = scmp.ne.s32.totalorder %s28, %s29
    %p40 = scmp.eq.s32.totalorder %s20, 0
    %p41 = por %p39, %p40
    %p42 = scmp.ne.s32.totalorder %s28, %s29
    %p43 = scmp.eq.s32.totalorder %s21, 1
    %p44 = por %p42, %p43
    %p46 = scmp.ne.s32.totalorder %s29, %s45
    %p47 = scmp.eq.s32.totalorder %s21, 0
    %p48 = por %p46, %p47
    %s50 = sadd.s32 %s49, 1
    %p53 = scmp.eq.s32.totalorder %s15, 1
    %p54 = scmp.ne.s32.totalorder %s49, %s51
    %p55 = scmp.eq.s32.totalorder %s15, 0
    %p56 = por %p54, %p55
    %p57 = scmp.ne.s32.totalorder %s49, %s51
    %p58 = scmp.eq.s32.totalorder %s20, 1
    %p59 = por %p57, %p58
    %p60 = scmp.ne.s32.totalorder %s51, %s52
    %p61 = scmp.eq.s32.totalorder %s20, 0
    %p62 = por %p60, %p61
    %p63 = scmp.ne.s32.totalorder %s51, %s52
    %p64 = scmp.eq.s32.totalorder %s21, 1
    %p65 = por %p63, %p64
    %p67 = scmp.ne.s32.totalorder %s52, %s66
    %p68 = scmp.eq.s32.totalorder %s21, 0
    %p69 = por %p67, %p68
    %s71 = sadd.s32 %s70, 1
    %p74 = scmp.eq.s32.totalorder %s15, 1
    %p75 = scmp.ne.s32.totalorder %s70, %s72
    %p76 = scmp.eq.s32.totalorder %s15, 0
    %p77 = por %p75, %p76
    %p78 = scmp.ne.s32.totalorder %s70, %s72
    %p79 = scmp.eq.s32.totalorder %s20, 1
    %p80 = por %p78, %p79
    %p81 = scmp.ne.s32.totalorder %s72, %s73
    %p82 = scmp.eq.s32.totalorder %s20, 0
    %p83 = por %p81, %p82
    %p84 = scmp.ne.s32.totalorder %s72, %s73
    %p85 = scmp.eq.s32.totalorder %s21, 1
    %p86 = por %p84, %p85
    %p88 = scmp.ne.s32.totalorder %s73, %s87
    %p89 = scmp.eq.s32.totalorder %s21, 0
    %p90 = por %p88, %p89
    %s92 = sadd.s32 %s91, 1
    %p95 = scmp.eq.s32.totalorder %s15, 1
    %p96 = scmp.ne.s32.totalorder %s91, %s93
    %p97 = scmp.eq.s32.totalorder %s15, 0
    %p98 = por %p96, %p97
    %p99 = scmp.ne.s32.totalorder %s91, %s93
    %p100 = scmp.eq.s32.totalorder %s20, 1
    %p101 = por %p99, %p100
    %p102 = scmp.ne.s32.totalorder %s93, %s94
    %p103 = scmp.eq.s32.totalorder %s20, 0
    %p104 = por %p102, %p103
    %p105 = scmp.ne.s32.totalorder %s93, %s94
    %p106 = scmp.eq.s32.totalorder %s21, 1
    %p107 = por %p105, %p106
    %p109 = scmp.ne.s32.totalorder %s94, %s108
    %p110 = scmp.eq.s32.totalorder %s21, 0
    %p111 = por %p109, %p110
    %s113 = sadd.s32 %s112, 1
    %p116 = scmp.eq.s32.totalorder %s15, 1
    %p117 = scmp.ne.s32.totalorder %s112, %s114
    %p118 = scmp.eq.s32.totalorder %s15, 0
    %p119 = por %p117, %p118
    %p120 = scmp.ne.s32.totalorder %s112, %s114
    %p121 = scmp.eq.s32.totalorder %s20, 1
    %p122 = por %p120, %p121
    %p123 = scmp.ne.s32.totalorder %s114, %s115
    %p124 = scmp.eq.s32.totalorder %s20, 0
    %p125 = por %p123, %p124
    %p126 = scmp.ne.s32.totalorder %s114, %s115
    %p127 = scmp.eq.s32.totalorder %s21, 1
    %p128 = por %p126, %p127
    %p130 = scmp.ne.s32.totalorder %s115, %s129
    %p131 = scmp.eq.s32.totalorder %s21, 0
    %p132 = por %p130, %p131
    %s134 = sadd.s32 %s133, 1
    %p137 = scmp.eq.s32.totalorder %s15, 1
    %p138 = scmp.ne.s32.totalorder %s133, %s135
    %p139 = scmp.eq.s32.totalorder %s15, 0
    %p140 = por %p138, %p139
    %p141 = scmp.ne.s32.totalorder %s133, %s135
    %p142 = scmp.eq.s32.totalorder %s20, 1
    %p143 = por %p141, %p142
    %p144 = scmp.ne.s32.totalorder %s135, %s136
    %p145 = scmp.eq.s32.totalorder %s20, 0
    %p146 = por %p144, %p145
    %p147 = scmp.ne.s32.totalorder %s135, %s136
    %p148 = scmp.eq.s32.totalorder %s21, 1
    %p149 = por %p147, %p148
    %p151 = scmp.ne.s32.totalorder %s136, %s150
    %p152 = scmp.eq.s32.totalorder %s21, 0
    %p153 = por %p151, %p152
    %s155 = sadd.s32 %s154, 1
    %p158 = scmp.eq.s32.totalorder %s15, 1
    %p159 = scmp.ne.s32.totalorder %s154, %s156
    %p160 = scmp.eq.s32.totalorder %s15, 0
    %p161 = por %p159, %p160
    %p162 = scmp.ne.s32.totalorder %s154, %s156
    %p163 = scmp.eq.s32.totalorder %s20, 1
    %p164 = por %p162, %p163
    %p165 = scmp.ne.s32.totalorder %s156, %s157
    %p166 = scmp.eq.s32.totalorder %s20, 0
    %p167 = por %p165, %p166
    %p168 = scmp.ne.s32.totalorder %s156, %s157
    %p169 = scmp.eq.s32.totalorder %s21, 1
    %p170 = por %p168, %p169
    %p172 = scmp.ne.s32.totalorder %s157, %s171
    %p173 = scmp.eq.s32.totalorder %s21, 0
    %p174 = por %p172, %p173
    %s175 = ssub.s32 %s15, %s22
    %p176 = scmp.eq.s32.totalorder %s175, 0
    %s178 = sadd.s32 %s177, 1
    %s179 = scalar_select %p176, %s177, %s178
    %p182 = pneg %p176
    %p183 = scmp.eq.s32.totalorder %s15, 1
    %p184 = por %p182, %p183
    %p185 = scmp.ne.s32.totalorder %s177, %s180
    %p186 = scmp.eq.s32.totalorder %s15, 0
    %p187 = por %p185, %p186
    %p188 = scmp.ne.s32.totalorder %s177, %s180
    %p189 = scmp.eq.s32.totalorder %s20, 1
    %p190 = por %p188, %p189
    %p191 = scmp.ne.s32.totalorder %s180, %s181
    %p192 = scmp.eq.s32.totalorder %s20, 0
    %p193 = por %p191, %p192
    %p194 = scmp.ne.s32.totalorder %s180, %s181
    %p195 = scmp.eq.s32.totalorder %s21, 1
    %p196 = por %p194, %p195
    %p198 = scmp.ne.s32.totalorder %s181, %s197
    %p199 = scmp.eq.s32.totalorder %s21, 0
    %p200 = por %p198, %p199
    %p201 = scmp.le.s32.totalorder 1, %s15
    %p202 = scmp.lt.s32.totalorder %s15, 3
    %p203 = pnand %p201, %p202
    %p204 = pneg %p203
    // Predicated region
    $region9: #{code_discriminator_pallas.1} parent=5 // pred_check
      _
    $region10: #{code_discriminator_pallas.1} parent=5 // pred_check_branch
      %206 = sbr.rel (%p203) target = $region12
    $region11: #{code_discriminator_pallas.1} parent=5 // pred_region
      %s207 = ssub.s32 %s15, 1
      // Predicated region
      $region13: #{code_discriminator_pallas.1} parent=11 // pred_check
        %p208 = pneg %p62
      $region14: #{code_discriminator_pallas.1} parent=11 // pred_check_branch
        %210 = sbr.rel (%p208) target = $region16
      $region15: #{code_discriminator_pallas.1} parent=11 // pred_region
        _
      $region16: #{code_discriminator_pallas.1} parent=11 // pred_fallthru
        _
      // Predicated region
      $region17: #{code_discriminator_pallas.1} parent=11 // pred_check
        %p211 = pneg %p83
      $region18: #{code_discriminator_pallas.1} parent=11 // pred_check_branch
        %213 = sbr.rel (%p211) target = $region20
      $region19: #{code_discriminator_pallas.1} parent=11 // pred_region
        _
      $region20: #{code_discriminator_pallas.1} parent=11 // pred_fallthru
        _
      // Predicated region
      $region21: #{code_discriminator_pallas.1} parent=11 // pred_check
        %p214 = pneg %p104
      $region22: #{code_discriminator_pallas.1} parent=11 // pred_check_branch
        %216 = sbr.rel (%p214) target = $region24
      $region23: #{code_discriminator_pallas.1} parent=11 // pred_region
        _
      $region24: #{code_discriminator_pallas.1} parent=11 // pred_fallthru
        _
      // Predicated region
      $region25: #{code_discriminator_pallas.1} parent=11 // pred_check
        %p217 = pneg %p125
      $region26: #{code_discriminator_pallas.1} parent=11 // pred_check_branch
        %219 = sbr.rel (%p217) target = $region28
      $region27: #{code_discriminator_pallas.1} parent=11 // pred_region
        _
      $region28: #{code_discriminator_pallas.1} parent=11 // pred_fallthru
        _
      // Predicated region
      $region29: #{code_discriminator_pallas.1} parent=11 // pred_check
        %p220 = pneg %p146
      $region30: #{code_discriminator_pallas.1} parent=11 // pred_check_branch
        %222 = sbr.rel (%p220) target = $region32
      $region31: #{code_discriminator_pallas.1} parent=11 // pred_region
        _
      $region32: #{code_discriminator_pallas.1} parent=11 // pred_fallthru
        _
      // Predicated region
      $region33: #{code_discriminator_pallas.1} parent=11 // pred_check
        %p223 = pneg %p167
      $region34: #{code_discriminator_pallas.1} parent=11 // pred_check_branch
        %225 = sbr.rel (%p223) target = $region36
      $region35: #{code_discriminator_pallas.1} parent=11 // pred_region
        _
      $region36: #{code_discriminator_pallas.1} parent=11 // pred_fallthru
        _
    $region12: #{code_discriminator_pallas.1} parent=5 // pred_fallthru
      _
    %p226 = scmp.lt.s32.totalorder %s15, 2
    // Predicated region
    $region37: #{code_discriminator_pallas.1} parent=5 // pred_check
      %p227 = pneg %p226
    $region38: #{code_discriminator_pallas.1} parent=5 // pred_check_branch
      %229 = sbr.rel (%p227) target = $region40
    $region39: #{code_discriminator_pallas.1} parent=5 // pred_region
      // Predicated region
      $region41: #{code_discriminator_pallas.1} parent=39 // pred_check
        %p230 = pneg %p35
      $region42: #{code_discriminator_pallas.1} parent=39 // pred_check_branch
        %232 = sbr.rel (%p230) target = $region44
      $region43: #{code_discriminator_pallas.1} parent=39 // pred_region
        %s233 = smul.u32 16, %s15
        %p234 = scmp.lt.s32.totalorder %s233, 31
        %s235 = scalar_select %p234, %s233, 31
        %s236 = smul.addr %s235, 8
        %s237 = scalar_lea.vmem %s0, %s236
        %s238 = smul.u32 16, %s15
      $region44: #{code_discriminator_pallas.1} parent=39 // pred_fallthru
        _
    $region40: #{code_discriminator_pallas.1} parent=5 // pred_fallthru
      _
    %p239 = scmp.le.s32.totalorder 1, %s15
    %p240 = scmp.lt.s32.totalorder %s15, 3
    %p241 = pnand %p239, %p240
    %p242 = pneg %p241
    // Predicated region
    $region45: #{code_discriminator_pallas.1} parent=5 // pred_check
      _
    $region46: #{code_discriminator_pallas.1} parent=5 // pred_check_branch
      %244 = sbr.rel (%p241) target = $region48
    $region47: #{code_discriminator_pallas.1} parent=5 // pred_region
      %s245 = ssub.s32 %s15, 1
      %s246 = smul.u32 16, %s20
      %p247 = scmp.lt.s32.totalorder %s246, 31
      %s248 = scalar_select %p247, %s246, 31
      %s249 = smul.addr %s248, 8
      %s250 = scalar_lea.vmem %s0, %s249
      %p251 = pneg %p41
      %p252 = pneg %p38
      %p253 = pneg %p62
      %p254 = pneg %p59
      %p255 = pneg %p83
      %p256 = pneg %p80
      %p257 = pneg %p104
      %p258 = pneg %p101
      %p259 = pneg %p125
      %p260 = pneg %p122
      %p261 = pneg %p146
      %p262 = pneg %p143
      %p263 = pneg %p167
      %p264 = pneg %p164
      %p265 = pneg %p193
      %p266 = pneg %p190
      %s267 = smul.u32 16, %s20
      %p268 = scmp.lt.s32.totalorder %s267, 31
      %s269 = scalar_select %p268, %s267, 31
      %s270 = smul.addr %s269, 8
      %s271 = scalar_lea.vmem %s7, %s270
      %s272 = smul.u32 16, %s20
      %p273 = scmp.lt.s32.totalorder %s272, 31
      %s274 = scalar_select %p273, %s272, 31
      %s275 = smul.addr %s274, 8
      %s276 = scalar_lea.vmem %s0, %s275
      %s277 = smul.u32 16, %s20
      %s278 = smul.u32 16, %s20
      %p279 = scmp.lt.s32.totalorder %s278, 31
      %s280 = scalar_select %p279, %s278, 31
      %s281 = smul.addr %s280, 8
      %s282 = scalar_lea.vmem %s7, %s281
      %s283 = smul.u32 16, %s20
      %v286 = vld [vmem:[%s276] sm:$0xff]
      %v287 = vld [vmem:[%s276 + $0x8] sm:$0xff]
      %v288 = vld [vmem:[%s276 + $0x10] sm:$0xff]
      %v289 = vld [vmem:[%s276 + $0x18] sm:$0xff]
      %v290 = vld [vmem:[%s276 + $0x20] sm:$0xff]
      %v291 = vld [vmem:[%s276 + $0x28] sm:$0xff]
      %v292 = vld [vmem:[%s276 + $0x30] sm:$0xff]
      %v293 = vld [vmem:[%s276 + $0x38] sm:$0xff]
      %v294 = vld [vmem:[%s276 + $0x40] sm:$0xff]
      %v295 = vld [vmem:[%s276 + $0x48] sm:$0xff]
      %v296 = vld [vmem:[%s276 + $0x50] sm:$0xff]
      %v297 = vld [vmem:[%s276 + $0x58] sm:$0xff]
      %v298 = vld [vmem:[%s276 + $0x60] sm:$0xff]
      %v299 = vld [vmem:[%s276 + $0x68] sm:$0xff]
      %v300 = vld [vmem:[%s276 + $0x70] sm:$0xff]
      %v301 = vld [vmem:[%s276 + $0x78] sm:$0xff]
      %v302 = vpack.c.bf16 %v287, %v286
      %v303 = vpack.c.bf16 %v289, %v288
      %v304 = vpack.c.bf16 %v291, %v290
      %v305 = vpack.c.bf16 %v293, %v292
      %v306 = vpack.c.bf16 %v295, %v294
      %v307 = vpack.c.bf16 %v297, %v296
      %v308 = vpack.c.bf16 %v299, %v298
      %v309 = vpack.c.bf16 %v301, %v300
      %v310 = vld [vmem:[%s1] sm:$0xff]
      %v311 = vld [vmem:[%s1 + $0x8] sm:$0xff]
      %v312 = vld [vmem:[%s1 + $0x10] sm:$0xff]
      %v313 = vld [vmem:[%s1 + $0x18] sm:$0xff]
      %v314 = vld [vmem:[%s1 + $0x20] sm:$0xff]
      %v315 = vld [vmem:[%s1 + $0x28] sm:$0xff]
      %v316 = vld [vmem:[%s1 + $0x30] sm:$0xff]
      %v317 = vld [vmem:[%s1 + $0x38] sm:$0xff]
      %v318 = vld [vmem:[%s1 + $0x40] sm:$0xff]
      %v319 = vld [vmem:[%s1 + $0x48] sm:$0xff]
      %v320 = vld [vmem:[%s1 + $0x50] sm:$0xff]
      %v321 = vld [vmem:[%s1 + $0x58] sm:$0xff]
      %v322 = vld [vmem:[%s1 + $0x60] sm:$0xff]
      %v323 = vld [vmem:[%s1 + $0x68] sm:$0xff]
      %v324 = vld [vmem:[%s1 + $0x70] sm:$0xff]
      %v325 = vld [vmem:[%s1 + $0x78] sm:$0xff]
      %v342 = vunpack.c.l.b16 %v310
      %v343 = vunpack.c.h.b16 %v310
      %v344 = vunpack.c.l.b16 %v311
      %v345 = vunpack.c.h.b16 %v311
      %v346 = vunpack.c.l.b16 %v312
      %v347 = vunpack.c.h.b16 %v312
      %v348 = vunpack.c.l.b16 %v313
      %v349 = vunpack.c.h.b16 %v313
      %v350 = vunpack.c.l.b16 %v314
      %v351 = vunpack.c.h.b16 %v314
      %v352 = vunpack.c.l.b16 %v315
      %v353 = vunpack.c.h.b16 %v315
      %v354 = vunpack.c.l.b16 %v316
      %v355 = vunpack.c.h.b16 %v316
      %v356 = vunpack.c.l.b16 %v317
      %v357 = vunpack.c.h.b16 %v317
      %v358 = vunpack.c.l.b16 %v318
      %v359 = vunpack.c.h.b16 %v318
      %v360 = vunpack.c.l.b16 %v319
      %v361 = vunpack.c.h.b16 %v319
      %v362 = vunpack.c.l.b16 %v320
      %v363 = vunpack.c.h.b16 %v320
      %v364 = vunpack.c.l.b16 %v321
      %v365 = vunpack.c.h.b16 %v321
      %v366 = vunpack.c.l.b16 %v322
      %v367 = vunpack.c.h.b16 %v322
      %v368 = vunpack.c.l.b16 %v323
      %v369 = vunpack.c.h.b16 %v323
      %v370 = vunpack.c.l.b16 %v324
      %v371 = vunpack.c.h.b16 %v324
      %v372 = vunpack.c.l.b16 %v325
      %v373 = vunpack.c.h.b16 %v325
      %v374 = vpack.c.b16 %v344, %v342
      %v375 = vpack.c.b16 %v345, %v343
      %v376 = vpack.c.b16 %v348, %v346
      %v377 = vpack.c.b16 %v349, %v347
      %v378 = vpack.c.b16 %v352, %v350
      %v379 = vpack.c.b16 %v353, %v351
      %v380 = vpack.c.b16 %v356, %v354
      %v381 = vpack.c.b16 %v357, %v355
      %v382 = vpack.c.b16 %v360, %v358
      %v383 = vpack.c.b16 %v361, %v359
      %v384 = vpack.c.b16 %v364, %v362
      %v385 = vpack.c.b16 %v365, %v363
      %v386 = vpack.c.b16 %v368, %v366
      %v387 = vpack.c.b16 %v369, %v367
      %v388 = vpack.c.b16 %v372, %v370
      %v389 = vpack.c.b16 %v373, %v371
      %406 = vmatprep.subr.bf16.mxu0 %v375
      %407 = vmatpush1.bf16.msra.mxu0 %v374
      %408 = vmatprep.subr.bf16.mxu0 %v377
      %409 = vmatpush1.bf16.msra.mxu0 %v376
      %410 = vmatprep.subr.bf16.mxu0 %v379
      %411 = vmatpush1.bf16.msra.mxu0 %v378
      %412 = vmatprep.subr.bf16.mxu0 %v381
      %413 = vmatpush1.bf16.msra.mxu0 %v380
      %414 = vmatprep.subr.bf16.mxu0 %v383
      %415 = vmatpush1.bf16.msra.mxu0 %v382
      %416 = vmatprep.subr.bf16.mxu0 %v385
      %417 = vmatpush1.bf16.msra.mxu0 %v384
      %418 = vmatprep.subr.bf16.mxu0 %v387
      %419 = vmatpush1.bf16.msra.mxu0 %v386
      %420 = vmatprep.subr.bf16.mxu0 %v389
      %421 = vmatpush1.bf16.msra.mxu0 %v388
      %422 = vmatprep.subr.bf16.mxu0 0
      %423 = vmatpush1.bf16.msra.mxu0 0
      %424 = vmatprep.subr.bf16.mxu0 0
      %425 = vmatpush1.bf16.msra.mxu0 0
      %426 = vmatprep.subr.bf16.mxu0 0
      %427 = vmatpush1.bf16.msra.mxu0 0
      %428 = vmatprep.subr.bf16.mxu0 0
      %429 = vmatpush1.bf16.msra.mxu0 0
      %430 = vmatprep.subr.bf16.mxu0 0
      %431 = vmatpush1.bf16.msra.mxu0 0
      %432 = vmatprep.subr.bf16.mxu0 0
      %433 = vmatpush1.bf16.msra.mxu0 0
      %434 = vmatprep.subr.bf16.mxu0 0
      %435 = vmatpush1.bf16.msra.mxu0 0
      %436 = vmatprep.subr.bf16.mxu0 0
      %437 = vmatpush1.bf16.msra.mxu0 0
      %438 = vmatprep.mubr.bf16.mxu0 0
      %439 = vmatmul.mubr.bf16.gmra.mrb[0].mxu0 %v302
      %v440 = vpop.f32.mrb[0].mxu0
      %v441 = vadd.f32 0.0, %v440
      %v442 = vpop.f32.mrb[0].mxu0
      %v443 = vadd.f32 0.0, %v442
      %v444 = vpop.f32.mrb[0].mxu0
      %v445 = vadd.f32 0.0, %v444
      %v446 = vpop.f32.mrb[0].mxu0
      %v447 = vadd.f32 0.0, %v446
      %448 = vmatprep.mubr.bf16.mxu0 0
      %449 = vmatmul.mubr.bf16.gmra.mrb[0].mxu0 %v303
      %v450 = vpop.f32.mrb[0].mxu0
      %v451 = vadd.f32 0.0, %v450
      %v452 = vpop.f32.mrb[0].mxu0
      %v453 = vadd.f32 0.0, %v452
      %v454 = vpop.f32.mrb[0].mxu0
      %v455 = vadd.f32 0.0, %v454
      %v456 = vpop.f32.mrb[0].mxu0
      %v457 = vadd.f32 0.0, %v456
      %458 = vmatprep.mubr.bf16.mxu0 0
      %459 = vmatmul.mubr.bf16.gmra.mrb[0].mxu0 %v304
      %v460 = vpop.f32.mrb[0].mxu0
      %v461 = vadd.f32 0.0, %v460
      %v462 = vpop.f32.mrb[0].mxu0
      %v463 = vadd.f32 0.0, %v462
      %v464 = vpop.f32.mrb[0].mxu0
      %v465 = vadd.f32 0.0, %v464
      %v466 = vpop.f32.mrb[0].mxu0
      %v467 = vadd.f32 0.0, %v466
      %468 = vmatprep.mubr.bf16.mxu0 0
      %469 = vmatmul.mubr.bf16.gmra.mrb[0].mxu0 %v305
      %v470 = vpop.f32.mrb[0].mxu0
      %v471 = vadd.f32 0.0, %v470
      %v472 = vpop.f32.mrb[0].mxu0
      %v473 = vadd.f32 0.0, %v472
      %v474 = vpop.f32.mrb[0].mxu0
      %v475 = vadd.f32 0.0, %v474
      %v476 = vpop.f32.mrb[0].mxu0
      %v477 = vadd.f32 0.0, %v476
      %478 = vmatprep.mubr.bf16.mxu0 0
      %479 = vmatmul.mubr.bf16.gmra.mrb[0].mxu0 %v306
      %v480 = vpop.f32.mrb[0].mxu0
      %v481 = vadd.f32 0.0, %v480
      %v482 = vpop.f32.mrb[0].mxu0
      %v483 = vadd.f32 0.0, %v482
      %v484 = vpop.f32.mrb[0].mxu0
      %v485 = vadd.f32 0.0, %v484
      %v486 = vpop.f32.mrb[0].mxu0
      %v487 = vadd.f32 0.0, %v486
      %488 = vmatprep.mubr.bf16.mxu0 0
      %489 = vmatmul.mubr.bf16.gmra.mrb[0].mxu0 %v307
      %v490 = vpop.f32.mrb[0].mxu0
      %v491 = vadd.f32 0.0, %v490
      %v492 = vpop.f32.mrb[0].mxu0
      %v493 = vadd.f32 0.0, %v492
      %v494 = vpop.f32.mrb[0].mxu0
      %v495 = vadd.f32 0.0, %v494
      %v496 = vpop.f32.mrb[0].mxu0
      %v497 = vadd.f32 0.0, %v496
      %498 = vmatprep.mubr.bf16.mxu0 0
      %499 = vmatmul.mubr.bf16.gmra.mrb[0].mxu0 %v308
      %v500 = vpop.f32.mrb[0].mxu0
      %v501 = vadd.f32 0.0, %v500
      %v502 = vpop.f32.mrb[0].mxu0
      %v503 = vadd.f32 0.0, %v502
      %v504 = vpop.f32.mrb[0].mxu0
      %v505 = vadd.f32 0.0, %v504
      %v506 = vpop.f32.mrb[0].mxu0
      %v507 = vadd.f32 0.0, %v506
      %508 = vmatprep.mubr.bf16.mxu0 0
      %509 = vmatmul.mubr.bf16.gmra.mrb[0].mxu0 %v309
      %v510 = vpop.f32.mrb[0].mxu0
      %v511 = vadd.f32 0.0, %v510
      %v512 = vpop.f32.mrb[0].mxu0
      %v513 = vadd.f32 0.0, %v512
      %v514 = vpop.f32.mrb[0].mxu0
      %v515 = vadd.f32 0.0, %v514
      %v516 = vpop.f32.mrb[0].mxu0
      %v517 = vadd.f32 0.0, %v516
      %518 = vdwg.mxu0
      %v519 = vpack.c.bf16 %v445, %v441
      %v520 = vpack.c.bf16 %v447, %v443
      %v521 = vpack.c.bf16 %v455, %v451
      %v522 = vpack.c.bf16 %v457, %v453
      %v523 = vpack.c.bf16 %v465, %v461
      %v524 = vpack.c.bf16 %v467, %v463
      %v525 = vpack.c.bf16 %v475, %v471
      %v526 = vpack.c.bf16 %v477, %v473
      %v527 = vpack.c.bf16 %v485, %v481
      %v528 = vpack.c.bf16 %v487, %v483
      %v529 = vpack.c.bf16 %v495, %v491
      %v530 = vpack.c.bf16 %v497, %v493
      %v531 = vpack.c.bf16 %v505, %v501
      %v532 = vpack.c.bf16 %v507, %v503
      %v533 = vpack.c.bf16 %v515, %v511
      %v534 = vpack.c.bf16 %v517, %v513
      %v535 = vld [vmem:[%s2] sm:$0x3]
      %v538 = vunpack.c.l.s4 1966171168
      %v539 = vunpack.c.0.s8 %v538
      %v540 = vlaneseq
      %v541 = vshrl.u32 %v540, 7
      %v542 = vsub.s32 %v539, %v541
      %v543 = vrot.slane %v535, %v542
      %v544 = vcombine.high %v543, %v543
      %v546 = vunpack.c.l.s4 1966171168
      %v547 = vunpack.c.0.s8 %v546
      %v548 = vlaneseq
      %v549 = vshrl.u32 %v548, 7
      %v550 = vsub.s32 %v547, %v549
      %v551 = vrot.slane %v543, %v550
      %v553 = vunpack.c.l.s4 1966171168
      %v554 = vunpack.c.0.s8 %v553
      %v555 = vlaneseq
      %v556 = vshrl.u32 %v555, 7
      %v557 = vsub.s32 %v554, %v556
      %v558 = vrot.slane %v544, %v557
      %v560 = vpack.i.b16 %v551, %v551
      %v562 = vlaneseq
      %v563 = vshrl.u32 %v562, 7
      %v564 = vsub.s32 0, %v563
      %v565 = vrot.slane %v560, %v564
      %v567 = vpack.i.b16 %v558, %v558
      %v569 = vlaneseq
      %v570 = vshrl.u32 %v569, 7
      %v571 = vsub.s32 0, %v570
      %v572 = vrot.slane %v567, %v571
      %v573 = vadd.bf16 %v519, %v565
      %v574 = vadd.bf16 %v520, %v572
      %v575 = vadd.bf16 %v521, %v565
      %v576 = vadd.bf16 %v522, %v572
      %v577 = vadd.bf16 %v523, %v565
      %v578 = vadd.bf16 %v524, %v572
      %v579 = vadd.bf16 %v525, %v565
      %v580 = vadd.bf16 %v526, %v572
      %v581 = vadd.bf16 %v527, %v565
      %v582 = vadd.bf16 %v528, %v572
      %v583 = vadd.bf16 %v529, %v565
      %v584 = vadd.bf16 %v530, %v572
      %v585 = vadd.bf16 %v531, %v565
      %v586 = vadd.bf16 %v532, %v572
      %v587 = vadd.bf16 %v533, %v565
      %v588 = vadd.bf16 %v534, %v572
      %v589 = vmul.bf16 %v573, 1045249613
      %v590 = vmul.bf16 %v574, 1045249613
      %v591 = vmul.bf16 %v575, 1045249613
      %v592 = vmul.bf16 %v576, 1045249613
      %v593 = vmul.bf16 %v577, 1045249613
      %v594 = vmul.bf16 %v578, 1045249613
      %v595 = vmul.bf16 %v579, 1045249613
      %v596 = vmul.bf16 %v580, 1045249613
      %v597 = vmul.bf16 %v581, 1045249613
      %v598 = vmul.bf16 %v582, 1045249613
      %v599 = vmul.bf16 %v583, 1045249613
      %v600 = vmul.bf16 %v584, 1045249613
      %v601 = vmul.bf16 %v585, 1045249613
      %v602 = vmul.bf16 %v586, 1045249613
      %v603 = vmul.bf16 %v587, 1045249613
      %v604 = vmul.bf16 %v588, 1045249613
      %v605 = vmax.bf16 %v573, %v589
      %v606 = vmax.bf16 %v574, %v590
      %v607 = vmax.bf16 %v575, %v591
      %v608 = vmax.bf16 %v576, %v592
      %v609 = vmax.bf16 %v577, %v593
      %v610 = vmax.bf16 %v578, %v594
      %v611 = vmax.bf16 %v579, %v595
      %v612 = vmax.bf16 %v580, %v596
      %v613 = vmax.bf16 %v581, %v597
      %v614 = vmax.bf16 %v582, %v598
      %v615 = vmax.bf16 %v583, %v599
      %v616 = vmax.bf16 %v584, %v600
      %v617 = vmax.bf16 %v585, %v601
      %v618 = vmax.bf16 %v586, %v602
      %v619 = vmax.bf16 %v587, %v603
      %v620 = vmax.bf16 %v588, %v604
      %v621 = vld [vmem:[%s3] sm:$0xff]
      %v622 = vld [vmem:[%s3 + $0x8] sm:$0xff]
      %v623 = vld [vmem:[%s3 + $0x10] sm:$0xff]
      %v624 = vld [vmem:[%s3 + $0x18] sm:$0xff]
      %v625 = vld [vmem:[%s3 + $0x20] sm:$0xff]
      %v626 = vld [vmem:[%s3 + $0x28] sm:$0xff]
      %v627 = vld [vmem:[%s3 + $0x30] sm:$0xff]
      %v628 = vld [vmem:[%s3 + $0x38] sm:$0xff]
      %v629 = vld [vmem:[%s3 + $0x40] sm:$0xff]
      %v630 = vld [vmem:[%s3 + $0x48] sm:$0xff]
      %v631 = vld [vmem:[%s3 + $0x50] sm:$0xff]
      %v632 = vld [vmem:[%s3 + $0x58] sm:$0xff]
      %v633 = vld [vmem:[%s3 + $0x60] sm:$0xff]
      %v634 = vld [vmem:[%s3 + $0x68] sm:$0xff]
      %v635 = vld [vmem:[%s3 + $0x70] sm:$0xff]
      %v636 = vld [vmem:[%s3 + $0x78] sm:$0xff]
      %v637 = vld [vmem:[%s3 + $0x80] sm:$0xff]
      %v638 = vld [vmem:[%s3 + $0x88] sm:$0xff]
      %v639 = vld [vmem:[%s3 + $0x90] sm:$0xff]
      %v640 = vld [vmem:[%s3 + $0x98] sm:$0xff]
      %v641 = vld [vmem:[%s3 + $0xa0] sm:$0xff]
      %v642 = vld [vmem:[%s3 + $0xa8] sm:$0xff]
      %v643 = vld [vmem:[%s3 + $0xb0] sm:$0xff]
      %v644 = vld [vmem:[%s3 + $0xb8] sm:$0xff]
      %v645 = vld [vmem:[%s3 + $0xc0] sm:$0xff]
      %v646 = vld [vmem:[%s3 + $0xc8] sm:$0xff]
      %v647 = vld [vmem:[%s3 + $0xd0] sm:$0xff]
      %v648 = vld [vmem:[%s3 + $0xd8] sm:$0xff]
      %v649 = vld [vmem:[%s3 + $0xe0] sm:$0xff]
      %v650 = vld [vmem:[%s3 + $0xe8] sm:$0xff]
      %v651 = vld [vmem:[%s3 + $0xf0] sm:$0xff]
      %v652 = vld [vmem:[%s3 + $0xf8] sm:$0xff]
      %v653 = vld [vmem:[%s4] sm:$0x3]
      %v655 = vlaneseq
      %v656 = vshrl.u32 %v655, 7
      %v657 = vsub.s32 0, %v656
      %v658 = vrot.slane %v653, %v657
      %v659 = vlaneseq
      %v660 = vshrl.u32 %v659, 7
      %v661 = vsub.s32 1, %v660
      %v662 = vrot.slane %v653, %v661
      %v697 = vunpack.c.l.b16 %v621
      %v698 = vunpack.c.h.b16 %v621
      %v699 = vunpack.c.l.b16 %v622
      %v700 = vunpack.c.h.b16 %v622
      %v701 = vunpack.c.l.b16 %v623
      %v702 = vunpack.c.h.b16 %v623
      %v703 = vunpack.c.l.b16 %v624
      %v704 = vunpack.c.h.b16 %v624
      %v705 = vunpack.c.l.b16 %v625
      %v706 = vunpack.c.h.b16 %v625
      %v707 = vunpack.c.l.b16 %v626
      %v708 = vunpack.c.h.b16 %v626
      %v709 = vunpack.c.l.b16 %v627
      %v710 = vunpack.c.h.b16 %v627
      %v711 = vunpack.c.l.b16 %v628
      %v712 = vunpack.c.h.b16 %v628
      %v713 = vunpack.c.l.b16 %v629
      %v714 = vunpack.c.h.b16 %v629
      %v715 = vunpack.c.l.b16 %v630
      %v716 = vunpack.c.h.b16 %v630
      %v717 = vunpack.c.l.b16 %v631
      %v718 = vunpack.c.h.b16 %v631
      %v719 = vunpack.c.l.b16 %v632
      %v720 = vunpack.c.h.b16 %v632
      %v721 = vunpack.c.l.b16 %v633
      %v722 = vunpack.c.h.b16 %v633
      %v723 = vunpack.c.l.b16 %v634
      %v724 = vunpack.c.h.b16 %v634
      %v725 = vunpack.c.l.b16 %v635
      %v726 = vunpack.c.h.b16 %v635
      %v727 = vunpack.c.l.b16 %v636
      %v728 = vunpack.c.h.b16 %v636
      %v729 = vunpack.c.l.b16 %v637
      %v730 = vunpack.c.h.b16 %v637
      %v731 = vunpack.c.l.b16 %v638
      %v732 = vunpack.c.h.b16 %v638
      %v733 = vunpack.c.l.b16 %v639
      %v734 = vunpack.c.h.b16 %v639
      %v735 = vunpack.c.l.b16 %v640
      %v736 = vunpack.c.h.b16 %v640
      %v737 = vunpack.c.l.b16 %v641
      %v738 = vunpack.c.h.b16 %v641
      %v739 = vunpack.c.l.b16 %v642
      %v740 = vunpack.c.h.b16 %v642
      %v741 = vunpack.c.l.b16 %v643
      %v742 = vunpack.c.h.b16 %v643
      %v743 = vunpack.c.l.b16 %v644
      %v744 = vunpack.c.h.b16 %v644
      %v745 = vunpack.c.l.b16 %v645
      %v746 = vunpack.c.h.b16 %v645
      %v747 = vunpack.c.l.b16 %v646
      %v748 = vunpack.c.h.b16 %v646
      %v749 = vunpack.c.l.b16 %v647
      %v750 = vunpack.c.h.b16 %v647
      %v751 = vunpack.c.l.b16 %v648
      %v752 = vunpack.c.h.b16 %v648
      %v753 = vunpack.c.l.b16 %v649
      %v754 = vunpack.c.h.b16 %v649
      %v755 = vunpack.c.l.b16 %v650
      %v756 = vunpack.c.h.b16 %v650
      %v757 = vunpack.c.l.b16 %v651
      %v758 = vunpack.c.h.b16 %v651
      %v759 = vunpack.c.l.b16 %v652
      %v760 = vunpack.c.h.b16 %v652
      %v761 = vpack.c.b16 %v699, %v697
      %v762 = vpack.c.b16 %v700, %v698
      %v763 = vpack.c.b16 %v703, %v701
      %v764 = vpack.c.b16 %v704, %v702
      %v765 = vpack.c.b16 %v707, %v705
      %v766 = vpack.c.b16 %v708, %v706
      %v767 = vpack.c.b16 %v711, %v709
      %v768 = vpack.c.b16 %v712, %v710
      %v769 = vpack.c.b16 %v715, %v713
      %v770 = vpack.c.b16 %v716, %v714
      %v771 = vpack.c.b16 %v719, %v717
      %v772 = vpack.c.b16 %v720, %v718
      %v773 = vpack.c.b16 %v723, %v721
      %v774 = vpack.c.b16 %v724, %v722
      %v775 = vpack.c.b16 %v727, %v725
      %v776 = vpack.c.b16 %v728, %v726
      %v777 = vpack.c.b16 %v731, %v729
      %v778 = vpack.c.b16 %v732, %v730
      %v779 = vpack.c.b16 %v735, %v733
      %v780 = vpack.c.b16 %v736, %v734
      %v781 = vpack.c.b16 %v739, %v737
      %v782 = vpack.c.b16 %v740, %v738
      %v783 = vpack.c.b16 %v743, %v741
      %v784 = vpack.c.b16 %v744, %v742
      %v785 = vpack.c.b16 %v747, %v745
      %v786 = vpack.c.b16 %v748, %v746
      %v787 = vpack.c.b16 %v751, %v749
      %v788 = vpack.c.b16 %v752, %v750
      %v789 = vpack.c.b16 %v755, %v753
      %v790 = vpack.c.b16 %v756, %v754
      %v791 = vpack.c.b16 %v759, %v757
      %v792 = vpack.c.b16 %v760, %v758
      %825 = vmatprep.subr.bf16.mxu0 %v762
      %826 = vmatpush1.bf16.msra.mxu0 %v761
      %827 = vmatprep.subr.bf16.mxu0 %v764
      %828 = vmatpush1.bf16.msra.mxu0 %v763
      %829 = vmatprep.subr.bf16.mxu0 %v766
      %830 = vmatpush1.bf16.msra.mxu0 %v765
      %831 = vmatprep.subr.bf16.mxu0 %v768
      %832 = vmatpush1.bf16.msra.mxu0 %v767
      %833 = vmatprep.subr.bf16.mxu0 %v770
      %834 = vmatpush1.bf16.msra.mxu0 %v769
      %835 = vmatprep.subr.bf16.mxu0 %v772
      %836 = vmatpush1.bf16.msra.mxu0 %v771
      %837 = vmatprep.subr.bf16.mxu0 %v774
      %838 = vmatpush1.bf16.msra.mxu0 %v773
      %839 = vmatprep.subr.bf16.mxu0 %v776
      %840 = vmatpush1.bf16.msra.mxu0 %v775
      %841 = vmatprep.subr.bf16.mxu0 %v778
      %842 = vmatpush1.bf16.msra.mxu0 %v777
      %843 = vmatprep.subr.bf16.mxu0 %v780
      %844 = vmatpush1.bf16.msra.mxu0 %v779
      %845 = vmatprep.subr.bf16.mxu0 %v782
      %846 = vmatpush1.bf16.msra.mxu0 %v781
      %847 = vmatprep.subr.bf16.mxu0 %v784
      %848 = vmatpush1.bf16.msra.mxu0 %v783
      %849 = vmatprep.subr.bf16.mxu0 %v786
      %850 = vmatpush1.bf16.msra.mxu0 %v785
      %851 = vmatprep.subr.bf16.mxu0 %v788
      %852 = vmatpush1.bf16.msra.mxu0 %v787
      %853 = vmatprep.subr.bf16.mxu0 %v790
      %854 = vmatpush1.bf16.msra.mxu0 %v789
      %855 = vmatprep.subr.bf16.mxu0 %v792
      %856 = vmatpush1.bf16.msra.mxu0 %v791
      %857 = vmatprep.mubr.bf16.mxu0 %v606
      %858 = vmatmul.mubr.bf16.gmra.mrb[0].mxu0 %v605
      %v859 = vpop.f32.mrb[0].mxu0
      %v860 = vadd.f32 %v658, %v859
      %v861 = vpop.f32.mrb[0].mxu0
      %v862 = vadd.f32 %v662, %v861
      %v863 = vpop.f32.mrb[0].mxu0
      %v864 = vadd.f32 %v658, %v863
      %v865 = vpop.f32.mrb[0].mxu0
      %v866 = vadd.f32 %v662, %v865
      %867 = vmatprep.mubr.bf16.mxu0 %v608
      %868 = vmatmul.mubr.bf16.gmra.mrb[0].mxu0 %v607
      %v869 = vpop.f32.mrb[0].mxu0
      %v870 = vadd.f32 %v658, %v869
      %v871 = vpop.f32.mrb[0].mxu0
      %v872 = vadd.f32 %v662, %v871
      %v873 = vpop.f32.mrb[0].mxu0
      %v874 = vadd.f32 %v658, %v873
      %v875 = vpop.f32.mrb[0].mxu0
      %v876 = vadd.f32 %v662, %v875
      %877 = vmatprep.mubr.bf16.mxu0 %v610
      %878 = vmatmul.mubr.bf16.gmra.mrb[0].mxu0 %v609
      %v879 = vpop.f32.mrb[0].mxu0
      %v880 = vadd.f32 %v658, %v879
      %v881 = vpop.f32.mrb[0].mxu0
      %v882 = vadd.f32 %v662, %v881
      %v883 = vpop.f32.mrb[0].mxu0
      %v884 = vadd.f32 %v658, %v883
      %v885 = vpop.f32.mrb[0].mxu0
      %v886 = vadd.f32 %v662, %v885
      %887 = vmatprep.mubr.bf16.mxu0 %v612
      %888 = vmatmul.mubr.bf16.gmra.mrb[0].mxu0 %v611
      %v889 = vpop.f32.mrb[0].mxu0
      %v890 = vadd.f32 %v658, %v889
      %v891 = vpop.f32.mrb[0].mxu0
      %v892 = vadd.f32 %v662, %v891
      %v893 = vpop.f32.mrb[0].mxu0
      %v894 = vadd.f32 %v658, %v893
      %v895 = vpop.f32.mrb[0].mxu0
      %v896 = vadd.f32 %v662, %v895
      %897 = vmatprep.mubr.bf16.mxu0 %v614
      %898 = vmatmul.mubr.bf16.gmra.mrb[0].mxu0 %v613
      %v899 = vpop.f32.mrb[0].mxu0
      %v900 = vadd.f32 %v658, %v899
      %v901 = vpop.f32.mrb[0].mxu0
      %v902 = vadd.f32 %v662, %v901
      %v903 = vpop.f32.mrb[0].mxu0
      %v904 = vadd.f32 %v658, %v903
      %v905 = vpop.f32.mrb[0].mxu0
      %v906 = vadd.f32 %v662, %v905
      %907 = vmatprep.mubr.bf16.mxu0 %v616
      %908 = vmatmul.mubr.bf16.gmra.mrb[0].mxu0 %v615
      %v909 = vpop.f32.mrb[0].mxu0
      %v910 = vadd.f32 %v658, %v909
      %v911 = vpop.f32.mrb[0].mxu0
      %v912 = vadd.f32 %v662, %v911
      %v913 = vpop.f32.mrb[0].mxu0
      %v914 = vadd.f32 %v658, %v913
      %v915 = vpop.f32.mrb[0].mxu0
      %v916 = vadd.f32 %v662, %v915
      %917 = vmatprep.mubr.bf16.mxu0 %v618
      %918 = vmatmul.mubr.bf16.gmra.mrb[0].mxu0 %v617
      %v919 = vpop.f32.mrb[0].mxu0
      %v920 = vadd.f32 %v658, %v919
      %v921 = vpop.f32.mrb[0].mxu0
      %v922 = vadd.f32 %v662, %v921
      %v923 = vpop.f32.mrb[0].mxu0
      %v924 = vadd.f32 %v658, %v923
      %v925 = vpop.f32.mrb[0].mxu0
      %v926 = vadd.f32 %v662, %v925
      %927 = vmatprep.mubr.bf16.mxu0 %v620
      %928 = vmatmul.mubr.bf16.gmra.mrb[0].mxu0 %v619
      %v929 = vpop.f32.mrb[0].mxu0
      %v930 = vadd.f32 %v658, %v929
      %v931 = vpop.f32.mrb[0].mxu0
      %v932 = vadd.f32 %v662, %v931
      %v933 = vpop.f32.mrb[0].mxu0
      %v934 = vadd.f32 %v658, %v933
      %v935 = vpop.f32.mrb[0].mxu0
      %v936 = vadd.f32 %v662, %v935
      %937 = vdwg.mxu0
      %v938 = vmul.f32 %v860, 0.2
      %v939 = vmul.f32 %v862, 0.2
      %v940 = vmul.f32 %v864, 0.2
      %v941 = vmul.f32 %v866, 0.2
      %v942 = vmul.f32 %v870, 0.2
      %v943 = vmul.f32 %v872, 0.2
      %v944 = vmul.f32 %v874, 0.2
      %v945 = vmul.f32 %v876, 0.2
      %v946 = vmul.f32 %v880, 0.2
      %v947 = vmul.f32 %v882, 0.2
      %v948 = vmul.f32 %v884, 0.2
      %v949 = vmul.f32 %v886, 0.2
      %v950 = vmul.f32 %v890, 0.2
      %v951 = vmul.f32 %v892, 0.2
      %v952 = vmul.f32 %v894, 0.2
      %v953 = vmul.f32 %v896, 0.2
      %v954 = vmul.f32 %v900, 0.2
      %v955 = vmul.f32 %v902, 0.2
      %v956 = vmul.f32 %v904, 0.2
      %v957 = vmul.f32 %v906, 0.2
      %v958 = vmul.f32 %v910, 0.2
      %v959 = vmul.f32 %v912, 0.2
      %v960 = vmul.f32 %v914, 0.2
      %v961 = vmul.f32 %v916, 0.2
      %v962 = vmul.f32 %v920, 0.2
      %v963 = vmul.f32 %v922, 0.2
      %v964 = vmul.f32 %v924, 0.2
      %v965 = vmul.f32 %v926, 0.2
      %v966 = vmul.f32 %v930, 0.2
      %v967 = vmul.f32 %v932, 0.2
      %v968 = vmul.f32 %v934, 0.2
      %v969 = vmul.f32 %v936, 0.2
      %v970 = vmax.f32 %v860, %v938
      %v971 = vmax.f32 %v862, %v939
      %v972 = vmax.f32 %v864, %v940
      %v973 = vmax.f32 %v866, %v941
      %v974 = vmax.f32 %v870, %v942
      %v975 = vmax.f32 %v872, %v943
      %v976 = vmax.f32 %v874, %v944
      %v977 = vmax.f32 %v876, %v945
      %v978 = vmax.f32 %v880, %v946
      %v979 = vmax.f32 %v882, %v947
      %v980 = vmax.f32 %v884, %v948
      %v981 = vmax.f32 %v886, %v949
      %v982 = vmax.f32 %v890, %v950
      %v983 = vmax.f32 %v892, %v951
      %v984 = vmax.f32 %v894, %v952
      %v985 = vmax.f32 %v896, %v953
      %v986 = vmax.f32 %v900, %v954
      %v987 = vmax.f32 %v902, %v955
      %v988 = vmax.f32 %v904, %v956
      %v989 = vmax.f32 %v906, %v957
      %v990 = vmax.f32 %v910, %v958
      %v991 = vmax.f32 %v912, %v959
      %v992 = vmax.f32 %v914, %v960
      %v993 = vmax.f32 %v916, %v961
      %v994 = vmax.f32 %v920, %v962
      %v995 = vmax.f32 %v922, %v963
      %v996 = vmax.f32 %v924, %v964
      %v997 = vmax.f32 %v926, %v965
      %v998 = vmax.f32 %v930, %v966
      %v999 = vmax.f32 %v932, %v967
      %v1000 = vmax.f32 %v934, %v968
      %v1001 = vmax.f32 %v936, %v969
      %v1002 = vld [vmem:[%s5] sm:$0x3]
      %v1004 = vlaneseq
      %v1005 = vshrl.u32 %v1004, 7
      %v1006 = vsub.s32 0, %v1005
      %v1007 = vrot.slane %v1002, %v1006
      %v1008 = vlaneseq
      %v1009 = vshrl.u32 %v1008, 7
      %v1010 = vsub.s32 1, %v1009
      %v1011 = vrot.slane %v1002, %v1010
      %v1014 = vmul.f32 %v970, %v1007
      %v1015 = vmul.f32 %v971, %v1011
      %v1016 = vmul.f32 %v972, %v1007
      %v1017 = vmul.f32 %v973, %v1011
      %v1018 = vmul.f32 %v974, %v1007
      %v1019 = vmul.f32 %v975, %v1011
      %v1020 = vmul.f32 %v976, %v1007
      %v1021 = vmul.f32 %v977, %v1011
      %v1022 = vmul.f32 %v978, %v1007
      %v1023 = vmul.f32 %v979, %v1011
      %v1024 = vmul.f32 %v980, %v1007
      %v1025 = vmul.f32 %v981, %v1011
      %v1026 = vmul.f32 %v982, %v1007
      %v1027 = vmul.f32 %v983, %v1011
      %v1028 = vmul.f32 %v984, %v1007
      %v1029 = vmul.f32 %v985, %v1011
      %v1030 = vmul.f32 %v986, %v1007
      %v1031 = vmul.f32 %v987, %v1011
      %v1032 = vmul.f32 %v988, %v1007
      %v1033 = vmul.f32 %v989, %v1011
      %v1034 = vmul.f32 %v990, %v1007
      %v1035 = vmul.f32 %v991, %v1011
      %v1036 = vmul.f32 %v992, %v1007
      %v1037 = vmul.f32 %v993, %v1011
      %v1038 = vmul.f32 %v994, %v1007
      %v1039 = vmul.f32 %v995, %v1011
      %v1040 = vmul.f32 %v996, %v1007
      %v1041 = vmul.f32 %v997, %v1011
      %v1042 = vmul.f32 %v998, %v1007
      %v1043 = vmul.f32 %v999, %v1011
      %v1044 = vmul.f32 %v1000, %v1007
      %v1045 = vmul.f32 %v1001, %v1011
      %v1046 = vadd.f32 %v1014, %v1015
      %1047 = vadd.xlane.f32.xlu0 %v1046
      %v1048 = vpop.xlane.xlu0 %1047
      %v1049 = vadd.f32 %v1016, %v1017
      %1050 = vadd.xlane.f32.xlu0 %v1049
      %v1051 = vpop.xlane.xlu0 %1050
      %v1052 = vadd.f32 %v1018, %v1019
      %1053 = vadd.xlane.f32.xlu0 %v1052
      %v1054 = vpop.xlane.xlu0 %1053
      %v1055 = vadd.f32 %v1020, %v1021
      %1056 = vadd.xlane.f32.xlu0 %v1055
      %v1057 = vpop.xlane.xlu0 %1056
      %v1058 = vadd.f32 %v1022, %v1023
      %1059 = vadd.xlane.f32.xlu0 %v1058
      %v1060 = vpop.xlane.xlu0 %1059
      %v1061 = vadd.f32 %v1024, %v1025
      %1062 = vadd.xlane.f32.xlu0 %v1061
      %v1063 = vpop.xlane.xlu0 %1062
      %v1064 = vadd.f32 %v1026, %v1027
      %1065 = vadd.xlane.f32.xlu0 %v1064
      %v1066 = vpop.xlane.xlu0 %1065
      %v1067 = vadd.f32 %v1028, %v1029
      %1068 = vadd.xlane.f32.xlu0 %v1067
      %v1069 = vpop.xlane.xlu0 %1068
      %v1070 = vadd.f32 %v1030, %v1031
      %1071 = vadd.xlane.f32.xlu0 %v1070
      %v1072 = vpop.xlane.xlu0 %1071
      %v1073 = vadd.f32 %v1032, %v1033
      %1074 = vadd.xlane.f32.xlu0 %v1073
      %v1075 = vpop.xlane.xlu0 %1074
      %v1076 = vadd.f32 %v1034, %v1035
      %1077 = vadd.xlane.f32.xlu0 %v1076
      %v1078 = vpop.xlane.xlu0 %1077
      %v1079 = vadd.f32 %v1036, %v1037
      %1080 = vadd.xlane.f32.xlu0 %v1079
      %v1081 = vpop.xlane.xlu0 %1080
      %v1082 = vadd.f32 %v1038, %v1039
      %1083 = vadd.xlane.f32.xlu0 %v1082
      %v1084 = vpop.xlane.xlu0 %1083
      %v1085 = vadd.f32 %v1040, %v1041
      %1086 = vadd.xlane.f32.xlu0 %v1085
      %v1087 = vpop.xlane.xlu0 %1086
      %v1088 = vadd.f32 %v1042, %v1043
      %1089 = vadd.xlane.f32.xlu0 %v1088
      %v1090 = vpop.xlane.xlu0 %1089
      %v1091 = vadd.f32 %v1044, %v1045
      %1092 = vadd.xlane.f32.xlu0 %v1091
      %v1093 = vpop.xlane.xlu0 %1092
      %v1094 = vld [vmem:[#allocation2] sm:$0x1]
      %v1096 = vlaneseq
      %v1097 = vshrl.u32 %v1096, 7
      %v1098 = vsub.s32 0, %v1097
      %v1099 = vrot.slane %v1094, %v1098
      %v1101 = vadd.f32 %v1048, %v1099
      %v1102 = vadd.f32 %v1051, %v1099
      %v1103 = vadd.f32 %v1054, %v1099
      %v1104 = vadd.f32 %v1057, %v1099
      %v1105 = vadd.f32 %v1060, %v1099
      %v1106 = vadd.f32 %v1063, %v1099
      %v1107 = vadd.f32 %v1066, %v1099
      %v1108 = vadd.f32 %v1069, %v1099
      %v1109 = vadd.f32 %v1072, %v1099
      %v1110 = vadd.f32 %v1075, %v1099
      %v1111 = vadd.f32 %v1078, %v1099
      %v1112 = vadd.f32 %v1081, %v1099
      %v1113 = vadd.f32 %v1084, %v1099
      %v1114 = vadd.f32 %v1087, %v1099
      %v1115 = vadd.f32 %v1090, %v1099
      %v1116 = vadd.f32 %v1093, %v1099
      %vm1117 = vcmask 7168
      %1118 = vst.msk [vmem:[%s282] sm:$0xff] %vm1117, %v1101
      %1119 = vst.msk [vmem:[%s282 + $0x8] sm:$0xff] %vm1117, %v1102
      %1120 = vst.msk [vmem:[%s282 + $0x10] sm:$0xff] %vm1117, %v1103
      %1121 = vst.msk [vmem:[%s282 + $0x18] sm:$0xff] %vm1117, %v1104
      %1122 = vst.msk [vmem:[%s282 + $0x20] sm:$0xff] %vm1117, %v1105
      %1123 = vst.msk [vmem:[%s282 + $0x28] sm:$0xff] %vm1117, %v1106
      %1124 = vst.msk [vmem:[%s282 + $0x30] sm:$0xff] %vm1117, %v1107
      %1125 = vst.msk [vmem:[%s282 + $0x38] sm:$0xff] %vm1117, %v1108
      %1126 = vst.msk [vmem:[%s282 + $0x40] sm:$0xff] %vm1117, %v1109
      %1127 = vst.msk [vmem:[%s282 + $0x48] sm:$0xff] %vm1117, %v1110
      %1128 = vst.msk [vmem:[%s282 + $0x50] sm:$0xff] %vm1117, %v1111
      %1129 = vst.msk [vmem:[%s282 + $0x58] sm:$0xff] %vm1117, %v1112
      %1130 = vst.msk [vmem:[%s282 + $0x60] sm:$0xff] %vm1117, %v1113
      %1131 = vst.msk [vmem:[%s282 + $0x68] sm:$0xff] %vm1117, %v1114
      %1132 = vst.msk [vmem:[%s282 + $0x70] sm:$0xff] %vm1117, %v1115
      %1133 = vst.msk [vmem:[%s282 + $0x78] sm:$0xff] %vm1117, %v1116
      %s1134 = smul.u32 16, %s20
      %p1135 = scmp.lt.s32.totalorder %s1134, 31
      %s1136 = scalar_select %p1135, %s1134, 31
      %s1137 = smul.addr %s1136, 8
      %s1138 = scalar_lea.vmem %s7, %s1137
      // Predicated region
      $region49: #{code_discriminator_pallas.1} parent=47 // pred_check
        %p1139 = pneg %p190
      $region50: #{code_discriminator_pallas.1} parent=47 // pred_check_branch
        %1141 = sbr.rel (%p1139) target = $region52
      $region51: #{code_discriminator_pallas.1} parent=47 // pred_region
        %s1142 = smul.u32 16, %s20
      $region52: #{code_discriminator_pallas.1} parent=47 // pred_fallthru
        _
    $region48: #{code_discriminator_pallas.1} parent=5 // pred_fallthru
      _
    %p1143 = scmp.le.s32.totalorder 2, %s15
    // Predicated region
    $region53: #{code_discriminator_pallas.1} parent=5 // pred_check
      %p1144 = pneg %p1143
    $region54: #{code_discriminator_pallas.1} parent=5 // pred_check_branch
      %1146 = sbr.rel (%p1144) target = $region56
    $region55: #{code_discriminator_pallas.1} parent=5 // pred_region
      %s1147 = ssub.s32 %s15, 2
      // Predicated region
      $region57: #{code_discriminator_pallas.1} parent=55 // pred_check
        %p1148 = pneg %p196
      $region58: #{code_discriminator_pallas.1} parent=55 // pred_check_branch
        %1150 = sbr.rel (%p1148) target = $region60
      $region59: #{code_discriminator_pallas.1} parent=55 // pred_region
        %s1151 = smul.u32 16, %s21
        %p1152 = scmp.lt.s32.totalorder %s1151, 31
        %s1153 = scalar_select %p1152, %s1151, 31
        %s1154 = smul.addr %s1153, 8
        %s1155 = scalar_lea.vmem %s7, %s1154
      $region60: #{code_discriminator_pallas.1} parent=55 // pred_fallthru
        _
    $region56: #{code_discriminator_pallas.1} parent=5 // pred_fallthru
      _
  $region6: #{code_discriminator_pallas.1} parent=0 // loop_footer
    %s19 = sadd.s32 1, %s15
  $region7: #{code_discriminator_pallas.1} parent=0 // loop_footer_branch
    %14 = sbr.rel target = $region3
  $region8: #{code_discriminator_pallas.1} parent=0 // loop_exit
    _

</llo_original>
